<compile_context>
chip_gen: v5e
topology: v5e:2x2
jax: 0.10.0
libtpu: 0.0.40
codegen_flags: <defaults>
</compile_context>

<pallas_src>
import functools

import jax
import jax.numpy as jnp
from jax.experimental import pallas as pl
from jax.experimental.pallas import tpu as pltpu


def _round_up(x: int, n: int) -> int:
    return ((x + n - 1) // n) * n


def _ceil_div(a: int, b: int) -> int:
    return -(-a // b)


def _vmem_capacity_bytes() -> int:
    try:
        return int(pltpu.get_tpu_info().vmem_capacity_bytes)
    except Exception:
        return 64 * 1024 * 1024  # conservative (v7x) fallback


def _pad_cast_2d(a, rows, cols, dt):
    """Zero-pad `a` to (rows, cols) and cast to dt; no-op when already aligned."""
    if a.shape == (rows, cols):
        return a if a.dtype == dt else a.astype(dt)
    out = jnp.zeros((rows, cols), dt)
    return out.at[: a.shape[0], : a.shape[1]].set(a.astype(dt))


def _swiglu_kernel(x_ref, w1_ref, w2_ref, w3_ref, o_ref, *scratch,
                   beta: float, approx_recip: bool, mode: str):
    # x_ref:  (tm, d_pad)      row tile of flattened activations
    # w1_ref: (d_pad, tn)      lin1 columns for hidden tile k
    # w2_ref: (d_pad, tn)      lin2 columns for hidden tile k
    # w3_ref: (tn, d_pad)      lin3 rows for hidden tile k
    # o_ref:  (tm, d_pad)      output row tile (resident across k)
    # scratch: () or (f32 (tm, d_pad) accumulator,) depending on `mode`
    x = x_ref[...]

    # Two MXU passes against the same resident x tile (f32 accumulation).
    h1 = jnp.dot(x, w1_ref[...], preferred_element_type=jnp.float32)
    h2 = jnp.dot(x, w2_ref[...], preferred_element_type=jnp.float32)

    # swish(h1) = h1 * sigmoid(beta * h1); exp + reciprocal ride the EUP slot.
    z = h1 if beta == 1.0 else beta * h1
    sig = pl.reciprocal(1.0 + jnp.exp(-z), approx=approx_recip)
    gated = (h1 * sig) * h2

    # Partial lin3 contribution for this hidden tile.
    partial = jnp.dot(gated.astype(w3_ref.dtype), w3_ref[...],
                      preferred_element_type=jnp.float32)

    if mode == "single":                       # nk == 1: no accumulation at all
        o_ref[...] = partial.astype(o_ref.dtype)
    elif mode == "out_acc":                    # f32 output: accumulate in o_ref
        k = pl.program_id(1)

        @pl.when(k == 0)
        def _init():
            o_ref[...] = partial

        @pl.when(k > 0)
        def _acc():
            o_ref[...] += partial
    else:                                      # "scratch_acc": f32 VMEM scratch
        acc_ref = scratch[0]
        k = pl.program_id(1)

        @pl.when(k == 0)
        def _init():
            acc_ref[...] = partial

        @pl.when(k > 0)
        def _acc():
            acc_ref[...] += partial

        @pl.when(k == pl.num_programs(1) - 1)
        def _store():
            o_ref[...] = acc_ref[...].astype(o_ref.dtype)


def feed_forward_swiglu(x, w1, w2, w3, *, beta: float = 1.0,
                        tm=None, tn=None, compute_dtype=jnp.bfloat16):
    """SwiGLU FFN: (swish(x @ w1, beta) * (x @ w2)) @ w3.

    x: (..., dim). w1, w2: (dim, hidden). w3: (hidden, dim).
    Weights are stored (in_dim, out_dim) — transposed vs nn.Linear's (out, in),
    math identical. Matmul operands run in `compute_dtype` (default bf16,
    MXU-native); accumulation and swish/gate math are f32. Pre-cast weights to
    `compute_dtype` (and keep dim/hidden multiples of 128) for copy-free calls.
    """
    orig_shape = x.shape
    out_dtype = x.dtype
    dim = orig_shape[-1]
    hidden = w1.shape[1]
    assert w1.shape == (dim, hidden)
    assert w2.shape == (dim, hidden) and w3.shape == (hidden, dim)

    x2d = x.reshape(-1, dim)
    m = x2d.shape[0]

    cdt = jnp.dtype(compute_dtype)
    cbytes = cdt.itemsize
    obytes = jnp.dtype(out_dtype).itemsize
    row_align = 8 * max(1, 4 // cbytes)        # 8 rows f32, 16 rows bf16

    # Lane alignment: 256 for large dims (2x256^2 MXU on v6e/v7x), else 128.
    d_align = 256 if dim >= 512 else 128
    d_pad = _round_up(dim, d_align)

    vmem_cap = _vmem_capacity_bytes()
    vmem_budget = max(vmem_cap - (8 << 20), 24 << 20)   # internal-scratch headroom

    if tm is None:
        tm = 512                                        # compute-bound on v6e/v7x rooflines
    if tn is None:
        tn = 512 if vmem_cap >= (96 << 20) else 256     # smaller weight tiles on v7x (64 MiB)

    # Row tiling; prefer >= 2 row blocks so both v7x TensorCores get work.
    tm_eff = min(tm, _round_up(m, row_align))
    if _round_up(m, tm_eff) // tm_eff < 2:
        half = _round_up(_ceil_div(m, 2), row_align)
        if row_align <= half < tm_eff:
            tm_eff = half

    tn_eff = min(tn, _round_up(hidden, 128))

    # Auto-retile (shrink tn, then tm) until the double-buffered plan fits VMEM.
    while True:
        h_pad = _round_up(hidden, tn_eff)
        nk = h_pad // tn_eff
        use_scratch = (nk > 1) and (jnp.dtype(out_dtype) != jnp.float32)
        vmem_est = (2 * tm_eff * d_pad * cbytes          # x tiles (double-buffered)
                    + 4 * d_pad * tn_eff * cbytes        # w1 + w2 tiles
                    + 2 * tn_eff * d_pad * cbytes        # w3 tiles
                    + 2 * tm_eff * d_pad * obytes)       # out tiles
        if use_scratch:
            vmem_est += tm_eff * d_pad * 4               # f32 accumulator
        if vmem_est <= vmem_budget:
            break
        if tn_eff > 128:
            tn_eff = max(128, _round_up(tn_eff // 2, 128))
        elif tm_eff > row_align:
            tm_eff = max(row_align, _round_up(tm_eff // 2, row_align))
        else:
            break

    m_pad = _round_up(m, tm_eff)
    n_row = m_pad // tm_eff

    if nk == 1:
        mode = "single"
    elif jnp.dtype(out_dtype) == jnp.float32:
        mode = "out_acc"
    else:
        mode = "scratch_acc"
    scratch_shapes = ([pltpu.VMEM((tm_eff, d_pad), jnp.float32)]
                      if mode == "scratch_acc" else [])

    # Zero-pad + cast (padding contributes exactly 0); no-op when aligned.
    xp = _pad_cast_2d(x2d, m_pad, d_pad, cdt)
    w1p = _pad_cast_2d(w1, d_pad, h_pad, cdt)
    w2p = _pad_cast_2d(w2, d_pad, h_pad, cdt)
    w3p = _pad_cast_2d(w3, h_pad, d_pad, cdt)

    vmem_limit = int(min(vmem_budget, max(vmem_est + (4 << 20), 32 << 20)))

    cost = pl.CostEstimate(
        flops=6 * m_pad * d_pad * h_pad,                 # 2 m d h (x2) + 2 m h d
        transcendentals=m_pad * h_pad,                   # exp in sigmoid
        bytes_accessed=int(m_pad * d_pad * (cbytes + obytes)           # x in, out
                           + n_row * 3 * d_pad * h_pad * cbytes),      # weights per row tile
    )

    kernel = functools.partial(
        _swiglu_kernel, beta=float(beta),
        approx_recip=(cdt == jnp.bfloat16), mode=mode)

    out = pl.pallas_call(
        kernel,
        out_shape=jax.ShapeDtypeStruct((m_pad, d_pad), out_dtype),
        grid_spec=pltpu.PrefetchScalarGridSpec(
            num_scalar_prefetch=0,
            grid=(n_row, nk),
            in_specs=[
                pl.BlockSpec((tm_eff, d_pad), lambda i, k: (i, 0)),     # x rows
                pl.BlockSpec((d_pad, tn_eff), lambda i, k: (0, k)),     # w1 cols
                pl.BlockSpec((d_pad, tn_eff), lambda i, k: (0, k)),     # w2 cols
                pl.BlockSpec((tn_eff, d_pad), lambda i, k: (k, 0)),     # w3 rows
            ],
            out_specs=pl.BlockSpec((tm_eff, d_pad), lambda i, k: (i, 0)),
            scratch_shapes=scratch_shapes,
        ),
        compiler_params=pltpu.CompilerParams(
            dimension_semantics=("parallel", "arbitrary"),
            vmem_limit_bytes=vmem_limit,
        ),
        cost_estimate=cost,
    )(xp, w1p, w2p, w3p)

    return out[:m, :dim].reshape(orig_shape)


def _reference(x, w1, w2, w3, beta=1.0):
    h1 = x @ w1
    swish = h1 / (1.0 + jnp.exp(-beta * h1))
    return (swish * (x @ w2)) @ w3


if __name__ == "__main__":
    # Module config: dim=32, multiplier=6 -> hidden = 6 * ceil(32/6) = 36
    dim = 32
    multiplier = 6
    hidden = multiplier * ((dim + multiplier - 1) // multiplier)
    batch, seq = 2, 8

    key = jax.random.PRNGKey(0)
    kx, k1, k2, k3 = jax.random.split(key, 4)

    x = jax.random.normal(kx, (batch, seq, dim), dtype=jnp.float32)
    # Deterministic synthetic weights, stored as (in_dim, out_dim).
    w1 = jax.random.normal(k1, (dim, hidden), dtype=jnp.float32) * 0.05
    w2 = jax.random.normal(k2, (dim, hidden), dtype=jnp.float32) * 0.05
    w3 = jax.random.normal(k3, (hidden, dim), dtype=jnp.float32) * 0.05

    ref = _reference(x.reshape(-1, dim), w1, w2, w3).reshape(x.shape)

    # f32 compute path (exact sigmoid) — tight tolerance vs the f32 reference.
    out_f32 = feed_forward_swiglu(x, w1, w2, w3, beta=1.0,
                                  compute_dtype=jnp.float32)
    out_f32 = jax.block_until_ready(out_f32)
    assert out_f32.shape == x.shape
    assert jnp.allclose(out_f32, ref, atol=1e-4, rtol=1e-4), "f32 mismatch vs reference"

    # Default bf16 MXU path — looser tolerance (bf16 rounding, approx reciprocal).
    out_bf16 = jax.block_until_ready(feed_forward_swiglu(x, w1, w2, w3, beta=1.0))
    assert jnp.allclose(out_bf16, ref, atol=2e-2, rtol=2e-2), "bf16 mismatch vs reference"

    # Non-trivial beta.
    ref_b = _reference(x.reshape(-1, dim), w1, w2, w3, beta=1.5).reshape(x.shape)
    out_b = jax.block_until_ready(
        feed_forward_swiglu(x, w1, w2, w3, beta=1.5, compute_dtype=jnp.float32))
    assert jnp.allclose(out_b, ref_b, atol=1e-4, rtol=1e-4), "beta path mismatch"

    # Multi-step hidden reduction (nk > 1): exercises the f32 o_ref accumulation
    # path and the bf16 scratch-accumulator path.
    dim2, hidden2 = 128, 384
    k4, k5, k6, k7 = jax.random.split(jax.random.PRNGKey(1), 4)
    x2 = jax.random.normal(k4, (batch, seq, dim2), dtype=jnp.float32)
    v1 = jax.random.normal(k5, (dim2, hidden2), dtype=jnp.float32) * 0.03
    v2 = jax.random.normal(k6, (dim2, hidden2), dtype=jnp.float32) * 0.03
    v3 = jax.random.normal(k7, (hidden2, dim2), dtype=jnp.float32) * 0.03
    ref2 = _reference(x2.reshape(-1, dim2), v1, v2, v3).reshape(x2.shape)

    out2 = jax.block_until_ready(
        feed_forward_swiglu(x2, v1, v2, v3, tn=128, compute_dtype=jnp.float32))
    assert jnp.allclose(out2, ref2, atol=1e-3, rtol=1e-3), "out_acc path mismatch"

    out2b = jax.block_until_ready(
        feed_forward_swiglu(x2.astype(jnp.bfloat16), v1, v2, v3, tn=128))
    assert jnp.allclose(out2b.astype(jnp.float32), ref2, atol=5e-2, rtol=5e-2), \
        "scratch_acc path mismatch"

    print("KERNEL_OK")
</pallas_src>

<mosaic_0001>
module attributes {stable_mosaic.version = 11 : i64} {
  func.func @_swiglu_kernel(%arg0: i32, %arg1: i32, %arg2: memref<8x128xf32, #tpu.memory_space<vmem>>, %arg3: memref<128x128xf32, #tpu.memory_space<vmem>>, %arg4: memref<128x128xf32, #tpu.memory_space<vmem>>, %arg5: memref<128x128xf32, #tpu.memory_space<vmem>>, %arg6: memref<8x128xf32, #tpu.memory_space<vmem>>) attributes {dimension_semantics = [#tpu.dimension_semantics<parallel>, #tpu.dimension_semantics<arbitrary>], iteration_bounds = array<i64: 2, 1>, scalar_prefetch = 0 : i64, scratch_operands = 0 : i64, tpu.core_type = #tpu.core_type<tc>, window_params = [{transform_indices = @transform_0, window_bounds = array<i64: 8, 128>}, {transform_indices = @transform_1, window_bounds = array<i64: 128, 128>}, {transform_indices = @transform_2, window_bounds = array<i64: 128, 128>}, {transform_indices = @transform_3, window_bounds = array<i64: 128, 128>}, {transform_indices = @transform_4, window_bounds = array<i64: 8, 128>}]} {
    %c0 = arith.constant 0 : index
    %c0_0 = arith.constant 0 : index
    %0 = vector.load %arg2[%c0, %c0_0] : memref<8x128xf32, #tpu.memory_space<vmem>>, vector<8x128xf32>
    %c0_1 = arith.constant 0 : index
    %c0_2 = arith.constant 0 : index
    %1 = vector.load %arg3[%c0_1, %c0_2] : memref<128x128xf32, #tpu.memory_space<vmem>>, vector<128x128xf32>
    %cst = arith.constant dense<0.000000e+00> : vector<8x128xf32>
    %2 = tpu.matmul %0, %1, %cst {dimension_numbers = #tpu.dot_dimension_numbers<[1], [0], [0], [1], [0, 0, 1, 1], [], []>} : vector<8x128xf32>, vector<128x128xf32>, vector<8x128xf32> -> vector<8x128xf32>
    %c0_3 = arith.constant 0 : index
    %c0_4 = arith.constant 0 : index
    %3 = vector.load %arg4[%c0_3, %c0_4] : memref<128x128xf32, #tpu.memory_space<vmem>>, vector<128x128xf32>
    %cst_5 = arith.constant dense<0.000000e+00> : vector<8x128xf32>
    %4 = tpu.matmul %0, %3, %cst_5 {dimension_numbers = #tpu.dot_dimension_numbers<[1], [0], [0], [1], [0, 0, 1, 1], [], []>} : vector<8x128xf32>, vector<128x128xf32>, vector<8x128xf32> -> vector<8x128xf32>
    %cst_6 = arith.constant 0.000000e+00 : f32
    %5 = vector.broadcast %cst_6 : f32 to vector<8x128xf32>
    %6 = arith.subf %5, %2 : vector<8x128xf32>
    %7 = math.exp %6 : vector<8x128xf32>
    %cst_7 = arith.constant 1.000000e+00 : f32
    %8 = vector.broadcast %cst_7 : f32 to vector<8x128xf32>
    %9 = arith.addf %8, %7 : vector<8x128xf32>
    %10 = tpu.reciprocal %9 : vector<8x128xf32> -> vector<8x128xf32>
    %11 = arith.mulf %2, %10 : vector<8x128xf32>
    %12 = arith.mulf %11, %4 : vector<8x128xf32>
    %c0_8 = arith.constant 0 : index
    %c0_9 = arith.constant 0 : index
    %13 = vector.load %arg5[%c0_8, %c0_9] : memref<128x128xf32, #tpu.memory_space<vmem>>, vector<128x128xf32>
    %cst_10 = arith.constant dense<0.000000e+00> : vector<8x128xf32>
    %14 = tpu.matmul %12, %13, %cst_10 {dimension_numbers = #tpu.dot_dimension_numbers<[1], [0], [0], [1], [0, 0, 1, 1], [], []>} : vector<8x128xf32>, vector<128x128xf32>, vector<8x128xf32> -> vector<8x128xf32>
    %c0_11 = arith.constant 0 : index
    %c0_12 = arith.constant 0 : index
    %15 = vector.load %arg6[%c0_11, %c0_12] : memref<8x128xf32, #tpu.memory_space<vmem>>, vector<8x128xf32>
    tpu.vector_store %arg6[%c0_11, %c0_12], %14 {strides = array<i32>} : memref<8x128xf32, #tpu.memory_space<vmem>>, vector<8x128xf32>,
    return
  }
  func.func @transform_0(%arg0: i32, %arg1: i32) -> (i32, i32) {
    %c0_i32 = arith.constant 0 : i32
    %c0_i32_0 = arith.constant 0 : i32
    return %arg0, %c0_i32 : i32, i32
  }
  func.func @transform_1(%arg0: i32, %arg1: i32) -> (i32, i32) {
    %c0_i32 = arith.constant 0 : i32
    %c0_i32_0 = arith.constant 0 : i32
    return %c0_i32, %arg1 : i32, i32
  }
  func.func @transform_2(%arg0: i32, %arg1: i32) -> (i32, i32) {
    %c0_i32 = arith.constant 0 : i32
    %c0_i32_0 = arith.constant 0 : i32
    return %c0_i32, %arg1 : i32, i32
  }
  func.func @transform_3(%arg0: i32, %arg1: i32) -> (i32, i32) {
    %c0_i32 = arith.constant 0 : i32
    %c0_i32_0 = arith.constant 0 : i32
    return %arg1, %c0_i32 : i32, i32
  }
  func.func @transform_4(%arg0: i32, %arg1: i32) -> (i32, i32) {
    %c0_i32 = arith.constant 0 : i32
    %c0_i32_0 = arith.constant 0 : i32
    return %arg0, %c0_i32 : i32, i32
  }
}

</mosaic_0001>

<llo_original>
// kernel: tpu_custom_call.1
$region0: #{tpu_custom_call.1}
  #allocation0 [shape = 'u32[]', space=smem, size = 0x4, offset = 0x4, fixed_abs, tag = 'smem constant byte address 0x4 - core index']
  #allocation1 [shape = 'u32[72,128]{1,0:T(1,128)}', space=vmem, size = 0x9000, scoped, tag = 'internal scratch']
  %s0 = inlined_call_operand.hbm [shape: f32[16,128], index: 0, kind: input, shape index: {}]
  %s1 = inlined_call_operand.hbm [shape: f32[128,128], index: 1, kind: input, shape index: {}]
  %s2 = inlined_call_operand.hbm [shape: f32[128,128], index: 2, kind: input, shape index: {}]
  %s3 = inlined_call_operand.hbm [shape: f32[128,128], index: 3, kind: input, shape index: {}]
  %s4 = inlined_call_operand.hbm [shape: f32[16,128], index: 4, kind: output, shape index: {}]
  %s5 = sld [smem:[#allocation0]]
  $region65: #{tpu_custom_call.1} parent=0
    _
  %s7 = ssub.s32 1, %s5
  %s8 = scalar_select 0, %s7, %s5
  $region1: #{tpu_custom_call.1} parent=0
    #allocation2 [shape = 'u8[8192]{0}', space=vmem, size = 0x2000, scoped, tag = 'input window, operand 0']
    #allocation3 [shape = 's32[2]{0}', space=sflag, size = 0x8, scoped, tag = 'scoped memory for tpu_custom_call.1']
    #allocation4 [shape = 's32[2]{0}', space=sflag, size = 0x8, scoped, tag = 'scoped memory for tpu_custom_call.1']
    #allocation5 [shape = 'u8[65536]{0}', space=vmem, size = 0x10000, scoped, tag = 'input window, operand 1, single buffered']
    #allocation6 [shape = 's32[1]{0}', space=sflag, size = 0x4, scoped, tag = 'scoped memory for tpu_custom_call.1']
    #allocation7 [shape = 'u8[65536]{0}', space=vmem, size = 0x10000, scoped, tag = 'input window, operand 2, single buffered']
    #allocation8 [shape = 'u8[65536]{0}', space=vmem, size = 0x10000, scoped, tag = 'input window, operand 3, single buffered']
    #allocation9 [shape = 's32[1]{0}', space=sflag, size = 0x4, scoped, tag = 'scoped memory for tpu_custom_call.1']
    #allocation10 [shape = 'u8[8192]{0}', space=vmem, size = 0x2000, scoped, tag = 'output window, operand 0']
    %9 = vsyncpa [#allocation3], 0
    %s10 = scalar_lea.sflag [#allocation3], 1
    %11 = vsyncpa %s10, 0
    %12 = vsyncpa [#allocation6], 0
    %13 = vsyncpa [#allocation9], 0
    %14 = vsyncpa [#allocation4], 0
    %s15 = scalar_lea.sflag [#allocation4], 1
    %16 = vsyncpa %s15, 0
    loop: start=0, step=1, limit=4
    $region2: #{tpu_custom_call.1} parent=1 // loop_pre_header
      _
    $region3: #{tpu_custom_call.1} parent=1 // loop_header
      %s18 = sphi 0, %s22
      %p19 = scmp.ge.s32.totalorder %s18, 4
      %s25 = sphi 0, %s37
      %s26 = sphi 0, %s33
      %s27 = sphi 0, %s25
      %s28 = sphi 0, %s26
      %s29 = sphi 0, %s27
      %s30 = sphi 0, %s28
      %s40 = sphi 0, %s42
      %s43 = sphi 0, %s40
      %s44 = sphi 0, %s43
      %s60 = sphi 0, %s44
      %s66 = sphi 0, %s68
      %s69 = sphi 0, %s66
      %s70 = sphi 0, %s69
      %s86 = sphi 0, %s70
      %s92 = sphi 0, %s94
      %s95 = sphi 0, %s92
      %s96 = sphi 0, %s95
      %s112 = sphi 0, %s96
      %s118 = sphi 0, %s120
      %s121 = sphi 0, %s118
      %s122 = sphi 0, %s121
      %s138 = sphi 0, %s122
      %s144 = sphi 0, %s146
      %s147 = sphi 0, %s144
      %s148 = sphi 0, %s147
      %s164 = sphi 0, %s148
    $region4: #{tpu_custom_call.1} parent=1 // loop_header_branch
      %21 = sbr.rel (%p19) target = $region8
    $region5: #{tpu_custom_call.1} parent=1 // loop_body
      %s23 = ssub.s32 %s18, 1
      %s24 = ssub.s32 %s18, 2
      %s31 = sadd.s32 1, %s26
      %p32 = scmp.ge.s32.totalorder %s31, 1
      %s33 = scalar_select %p32, 0, %s31
      %s34 = sadd.s32 1, %s25
      %s35 = scalar_select %p32, %s34, %s25
      %p36 = scmp.ge.s32.totalorder %s35, 2
      %s37 = scalar_select %p36, 0, %s35
      %s38 = ssub.s32 %s25, %s37
      %p39 = scmp.eq.s32.totalorder %s38, 0
      %s41 = sadd.s32 %s40, 1
      %s42 = scalar_select %p39, %s40, %s41
      %p45 = pneg %p39
      %p46 = scmp.eq.s32.totalorder %s18, 1
      %p47 = por %p45, %p46
      %p48 = scmp.ne.s32.totalorder %s40, %s43
      %p49 = scmp.eq.s32.totalorder %s18, 0
      %p50 = por %p48, %p49
      %p51 = scmp.ne.s32.totalorder %s40, %s43
      %p52 = scmp.eq.s32.totalorder %s23, 1
      %p53 = por %p51, %p52
      %p54 = scmp.ne.s32.totalorder %s43, %s44
      %p55 = scmp.eq.s32.totalorder %s23, 0
      %p56 = por %p54, %p55
      %p57 = scmp.ne.s32.totalorder %s43, %s44
      %p58 = scmp.eq.s32.totalorder %s24, 1
      %p59 = por %p57, %p58
      %p61 = scmp.ne.s32.totalorder %s44, %s60
      %p62 = scmp.eq.s32.totalorder %s24, 0
      %p63 = por %p61, %p62
      %s64 = ssub.s32 %s26, %s33
      %p65 = scmp.eq.s32.totalorder %s64, 0
      %s67 = sadd.s32 %s66, 1
      %s68 = scalar_select %p65, %s66, %s67
      %p71 = pneg %p65
      %p72 = scmp.eq.s32.totalorder %s18, 1
      %p73 = por %p71, %p72
      %p74 = scmp.ne.s32.totalorder %s66, %s69
      %p75 = scmp.eq.s32.totalorder %s18, 0
      %p76 = por %p74, %p75
      %p77 = scmp.ne.s32.totalorder %s66, %s69
      %p78 = scmp.eq.s32.totalorder %s23, 1
      %p79 = por %p77, %p78
      %p80 = scmp.ne.s32.totalorder %s69, %s70
      %p81 = scmp.eq.s32.totalorder %s23, 0
      %p82 = por %p80, %p81
      %p83 = scmp.ne.s32.totalorder %s69, %s70
      %p84 = scmp.eq.s32.totalorder %s24, 1
      %p85 = por %p83, %p84
      %p87 = scmp.ne.s32.totalorder %s70, %s86
      %p88 = scmp.eq.s32.totalorder %s24, 0
      %p89 = por %p87, %p88
      %s90 = ssub.s32 %s26, %s33
      %p91 = scmp.eq.s32.totalorder %s90, 0
      %s93 = sadd.s32 %s92, 1
      %s94 = scalar_select %p91, %s92, %s93
      %p97 = pneg %p91
      %p98 = scmp.eq.s32.totalorder %s18, 1
      %p99 = por %p97, %p98
      %p100 = scmp.ne.s32.totalorder %s92, %s95
      %p101 = scmp.eq.s32.totalorder %s18, 0
      %p102 = por %p100, %p101
      %p103 = scmp.ne.s32.totalorder %s92, %s95
      %p104 = scmp.eq.s32.totalorder %s23, 1
      %p105 = por %p103, %p104
      %p106 = scmp.ne.s32.totalorder %s95, %s96
      %p107 = scmp.eq.s32.totalorder %s23, 0
      %p108 = por %p106, %p107
      %p109 = scmp.ne.s32.totalorder %s95, %s96
      %p110 = scmp.eq.s32.totalorder %s24, 1
      %p111 = por %p109, %p110
      %p113 = scmp.ne.s32.totalorder %s96, %s112
      %p114 = scmp.eq.s32.totalorder %s24, 0
      %p115 = por %p113, %p114
      %s116 = ssub.s32 %s26, %s33
      %p117 = scmp.eq.s32.totalorder %s116, 0
      %s119 = sadd.s32 %s118, 1
      %s120 = scalar_select %p117, %s118, %s119
      %p123 = pneg %p117
      %p124 = scmp.eq.s32.totalorder %s18, 1
      %p125 = por %p123, %p124
      %p126 = scmp.ne.s32.totalorder %s118, %s121
      %p127 = scmp.eq.s32.totalorder %s18, 0
      %p128 = por %p126, %p127
      %p129 = scmp.ne.s32.totalorder %s118, %s121
      %p130 = scmp.eq.s32.totalorder %s23, 1
      %p131 = por %p129, %p130
      %p132 = scmp.ne.s32.totalorder %s121, %s122
      %p133 = scmp.eq.s32.totalorder %s23, 0
      %p134 = por %p132, %p133
      %p135 = scmp.ne.s32.totalorder %s121, %s122
      %p136 = scmp.eq.s32.totalorder %s24, 1
      %p137 = por %p135, %p136
      %p139 = scmp.ne.s32.totalorder %s122, %s138
      %p140 = scmp.eq.s32.totalorder %s24, 0
      %p141 = por %p139, %p140
      %s142 = ssub.s32 %s25, %s37
      %p143 = scmp.eq.s32.totalorder %s142, 0
      %s145 = sadd.s32 %s144, 1
      %s146 = scalar_select %p143, %s144, %s145
      %p149 = pneg %p143
      %p150 = scmp.eq.s32.totalorder %s18, 1
      %p151 = por %p149, %p150
      %p152 = scmp.ne.s32.totalorder %s144, %s147
      %p153 = scmp.eq.s32.totalorder %s18, 0
      %p154 = por %p152, %p153
      %p155 = scmp.ne.s32.totalorder %s144, %s147
      %p156 = scmp.eq.s32.totalorder %s23, 1
      %p157 = por %p155, %p156
      %p158 = scmp.ne.s32.totalorder %s147, %s148
      %p159 = scmp.eq.s32.totalorder %s23, 0
      %p160 = por %p158, %p159
      %p161 = scmp.ne.s32.totalorder %s147, %s148
      %p162 = scmp.eq.s32.totalorder %s24, 1
      %p163 = por %p161, %p162
      %p165 = scmp.ne.s32.totalorder %s148, %s164
      %p166 = scmp.eq.s32.totalorder %s24, 0
      %p167 = por %p165, %p166
      %p168 = scmp.le.s32.totalorder 1, %s18
      %p169 = scmp.lt.s32.totalorder %s18, 3
      %p170 = pnand %p168, %p169
      %p171 = pneg %p170
      // Predicated region
      $region9: #{tpu_custom_call.1} parent=5 // pred_check
        _
      $region10: #{tpu_custom_call.1} parent=5 // pred_check_branch
        %173 = sbr.rel (%p170) target = $region12
      $region11: #{tpu_custom_call.1} parent=5 // pred_region
        %s174 = ssub.s32 %s18, 1
        // Predicated region
        $region13: #{tpu_custom_call.1} parent=11 // pred_check
          %p175 = pneg %p82
        $region14: #{tpu_custom_call.1} parent=11 // pred_check_branch
          %177 = sbr.rel (%p175) target = $region16
        $region15: #{tpu_custom_call.1} parent=11 // pred_region
          %179 = vsyncadd [#allocation6], 0
          %s180 = smul.addr %s28, 8
          %s181 = scalar_lea.hbm %s1, %s180
          %s182 = sshll.u32 %s181, 4
          %s183 = int_to_ptr.hbm [resolvable:$true] %s182
          %s184 = sshll.u32 [#allocation5], 4
          %s185 = int_to_ptr.vmem [resolvable:$true] %s184
          %190 = dma.hbm_to_vmem [thread:$0]  %s183, 2048, %s185, [#allocation6], 128, 128, 8
        $region16: #{tpu_custom_call.1} parent=11 // pred_fallthru
          _
        // Predicated region
        $region17: #{tpu_custom_call.1} parent=11 // pred_check
          %p191 = pneg %p108
        $region18: #{tpu_custom_call.1} parent=11 // pred_check_branch
          %193 = sbr.rel (%p191) target = $region20
        $region19: #{tpu_custom_call.1} parent=11 // pred_region
          %195 = vsyncadd [#allocation6], 0
          %s196 = smul.addr %s28, 8
          %s197 = scalar_lea.hbm %s2, %s196
          %s198 = sshll.u32 %s197, 4
          %s199 = int_to_ptr.hbm [resolvable:$true] %s198
          %s200 = sshll.u32 [#allocation7], 4
          %s201 = int_to_ptr.vmem [resolvable:$true] %s200
          %206 = dma.hbm_to_vmem [thread:$0]  %s199, 2048, %s201, [#allocation6], 128, 128, 8
        $region20: #{tpu_custom_call.1} parent=11 // pred_fallthru
          _
        // Predicated region
        $region21: #{tpu_custom_call.1} parent=11 // pred_check
          %p207 = pneg %p134
        $region22: #{tpu_custom_call.1} parent=11 // pred_check_branch
          %209 = sbr.rel (%p207) target = $region24
        $region23: #{tpu_custom_call.1} parent=11 // pred_region
          %s210 = smul.u32 16, %s28
          %212 = vsyncadd [#allocation9], 0
          %s213 = smul.addr %s210, 8
          %s214 = scalar_lea.hbm %s3, %s213
          %s215 = sshll.u32 %s214, 4
          %s216 = int_to_ptr.hbm [resolvable:$true] %s215
          %s217 = sshll.u32 [#allocation8], 4
          %s218 = int_to_ptr.vmem [resolvable:$true] %s217
          %223 = dma.hbm_to_vmem [thread:$0]  %s216, 2048, %s218, [#allocation9], 128, 128, 8
        $region24: #{tpu_custom_call.1} parent=11 // pred_fallthru
          _
      $region12: #{tpu_custom_call.1} parent=5 // pred_fallthru
        _
      %p224 = scmp.lt.s32.totalorder %s18, 2
      // Predicated region
      $region25: #{tpu_custom_call.1} parent=5 // pred_check
        %p225 = pneg %p224
      $region26: #{tpu_custom_call.1} parent=5 // pred_check_branch
        %227 = sbr.rel (%p225) target = $region28
      $region27: #{tpu_custom_call.1} parent=5 // pred_region
        // Predicated region
        $region29: #{tpu_custom_call.1} parent=27 // pred_check
          %p228 = pneg %p50
        $region30: #{tpu_custom_call.1} parent=27 // pred_check_branch
          %230 = sbr.rel (%p228) target = $region32
        $region31: #{tpu_custom_call.1} parent=27 // pred_region
          %s231 = sand.u32 %s40, 1
          %s232 = scalar_lea.sflag [#allocation3], %s231
          %s233 = sand.u32 %s40, 1
          %s234 = smul.addr %s233, 8
          %s235 = scalar_lea.vmem [#allocation2], %s234
          %237 = vsyncadd %s232, 0
          %s238 = smul.addr %s25, 8
          %s239 = scalar_lea.hbm %s0, %s238
          %s241 = sshll.u32 %s239, 4
          %s242 = int_to_ptr.hbm [resolvable:$true] %s241
          %s243 = sshll.u32 %s235, 4
          %s244 = int_to_ptr.vmem [resolvable:$true] %s243
          %246 = dma.hbm_to_vmem [thread:$0]  %s242, 128, %s244, %s232
        $region32: #{tpu_custom_call.1} parent=27 // pred_fallthru
          _
      $region28: #{tpu_custom_call.1} parent=5 // pred_fallthru
        _
      %p247 = scmp.le.s32.totalorder 1, %s18
      %p248 = scmp.lt.s32.totalorder %s18, 3
      %p249 = pnand %p247, %p248
      %p250 = pneg %p249
      // Predicated region
      $region33: #{tpu_custom_call.1} parent=5 // pred_check
        _
      $region34: #{tpu_custom_call.1} parent=5 // pred_check_branch
        %252 = sbr.rel (%p249) target = $region36
      $region35: #{tpu_custom_call.1} parent=5 // pred_region
        %s253 = ssub.s32 %s18, 1
        %s254 = sand.u32 %s43, 1
        %s255 = scalar_lea.sflag [#allocation3], %s254
        %s256 = sand.u32 %s43, 1
        %s257 = smul.addr %s256, 8
        %s258 = scalar_lea.vmem [#allocation2], %s257
        // Predicated region
        $region37: #{tpu_custom_call.1} parent=35 // pred_check
          %p259 = pneg %p56
        $region38: #{tpu_custom_call.1} parent=35 // pred_check_branch
          %261 = sbr.rel (%p259) target = $region40
        $region39: #{tpu_custom_call.1} parent=35 // pred_region
          %263 = dma.done %s255, 128
        $region40: #{tpu_custom_call.1} parent=35 // pred_fallthru
          _
        // Predicated region
        $region41: #{tpu_custom_call.1} parent=35 // pred_check
          %p264 = pneg %p82
        $region42: #{tpu_custom_call.1} parent=35 // pred_check_branch
          %266 = sbr.rel (%p264) target = $region44
        $region43: #{tpu_custom_call.1} parent=35 // pred_region
          %268 = dma.done [#allocation6], 2048
        $region44: #{tpu_custom_call.1} parent=35 // pred_fallthru
          _
        // Predicated region
        $region45: #{tpu_custom_call.1} parent=35 // pred_check
          %p269 = pneg %p108
        $region46: #{tpu_custom_call.1} parent=35 // pred_check_branch
          %271 = sbr.rel (%p269) target = $region48
        $region47: #{tpu_custom_call.1} parent=35 // pred_region
          %273 = dma.done [#allocation6], 2048
        $region48: #{tpu_custom_call.1} parent=35 // pred_fallthru
          _
        // Predicated region
        $region49: #{tpu_custom_call.1} parent=35 // pred_check
          %p274 = pneg %p134
        $region50: #{tpu_custom_call.1} parent=35 // pred_check_branch
          %276 = sbr.rel (%p274) target = $region52
        $region51: #{tpu_custom_call.1} parent=35 // pred_region
          %278 = dma.done [#allocation9], 2048
        $region52: #{tpu_custom_call.1} parent=35 // pred_fallthru
          _
        %s279 = sand.u32 %s43, 1
        %s280 = scalar_lea.sflag [#allocation3], %s279
        %s281 = sand.u32 %s43, 1
        %s282 = smul.addr %s281, 8
        %s283 = scalar_lea.vmem [#allocation2], %s282
        %p284 = pneg %p56
        %p285 = pneg %p53
        %p286 = pneg %p82
        %p287 = pneg %p79
        %p288 = pneg %p108
        %p289 = pneg %p105
        %p290 = pneg %p134
        %p291 = pneg %p131
        %p292 = pneg %p160
        %p293 = pneg %p157
        %s294 = sand.u32 %s147, 1
        %s295 = scalar_lea.sflag [#allocation4], %s294
        %s296 = sand.u32 %s147, 1
        %s297 = smul.addr %s296, 8
        %s298 = scalar_lea.vmem [#allocation10], %s297
        %s299 = smul.u32 16, %s28
        %v300 = vld [vmem:[%s258] sm:$0xff]
        %v301 = vld [vmem:[#allocation5] sm:$0xff]
        %v302 = vld [vmem:[#allocation5 + $0x8] sm:$0xff]
        %v303 = vld [vmem:[#allocation5 + $0x10] sm:$0xff]
        %v304 = vld [vmem:[#allocation5 + $0x18] sm:$0xff]
        %v305 = vld [vmem:[#allocation5 + $0x20] sm:$0xff]
        %v306 = vld [vmem:[#allocation5 + $0x28] sm:$0xff]
        %v307 = vld [vmem:[#allocation5 + $0x30] sm:$0xff]
        %v308 = vld [vmem:[#allocation5 + $0x38] sm:$0xff]
        %v309 = vld [vmem:[#allocation5 + $0x40] sm:$0xff]
        %v310 = vld [vmem:[#allocation5 + $0x48] sm:$0xff]
        %v311 = vld [vmem:[#allocation5 + $0x50] sm:$0xff]
        %v312 = vld [vmem:[#allocation5 + $0x58] sm:$0xff]
        %v313 = vld [vmem:[#allocation5 + $0x60] sm:$0xff]
        %v314 = vld [vmem:[#allocation5 + $0x68] sm:$0xff]
        %v315 = vld [vmem:[#allocation5 + $0x70] sm:$0xff]
        %v316 = vld [vmem:[#allocation5 + $0x78] sm:$0xff]
        %317 = vmatpush.msra.mxu0 %v316
        %318 = vmatpush.msra.mxu0 %v315
        %319 = vmatpush.msra.mxu0 %v314
        %320 = vmatpush.msra.mxu0 %v313
        %321 = vmatpush.msra.mxu0 %v312
        %322 = vmatpush.msra.mxu0 %v311
        %323 = vmatpush.msra.mxu0 %v310
        %324 = vmatpush.msra.mxu0 %v309
        %325 = vmatpush.msra.mxu0 %v308
        %326 = vmatpush.msra.mxu0 %v307
        %327 = vmatpush.msra.mxu0 %v306
        %328 = vmatpush.msra.mxu0 %v305
        %329 = vmatpush.msra.mxu0 %v304
        %330 = vmatpush.msra.mxu0 %v303
        %331 = vmatpush.msra.mxu0 %v302
        %332 = vmatpush.msra.mxu0 %v301
        %333 = vmatmul.f32.gmra.mxu0 %v300
        %v334 = vpop.f32.mrf.mxu0
        %v335 = vadd.f32 0.0, %v334
        %336 = vdwg.mxu0
        %v337 = vld [vmem:[#allocation7] sm:$0xff]
        %v338 = vld [vmem:[#allocation7 + $0x8] sm:$0xff]
        %v339 = vld [vmem:[#allocation7 + $0x10] sm:$0xff]
        %v340 = vld [vmem:[#allocation7 + $0x18] sm:$0xff]
        %v341 = vld [vmem:[#allocation7 + $0x20] sm:$0xff]
        %v342 = vld [vmem:[#allocation7 + $0x28] sm:$0xff]
        %v343 = vld [vmem:[#allocation7 + $0x30] sm:$0xff]
        %v344 = vld [vmem:[#allocation7 + $0x38] sm:$0xff]
        %v345 = vld [vmem:[#allocation7 + $0x40] sm:$0xff]
        %v346 = vld [vmem:[#allocation7 + $0x48] sm:$0xff]
        %v347 = vld [vmem:[#allocation7 + $0x50] sm:$0xff]
        %v348 = vld [vmem:[#allocation7 + $0x58] sm:$0xff]
        %v349 = vld [vmem:[#allocation7 + $0x60] sm:$0xff]
        %v350 = vld [vmem:[#allocation7 + $0x68] sm:$0xff]
        %v351 = vld [vmem:[#allocation7 + $0x70] sm:$0xff]
        %v352 = vld [vmem:[#allocation7 + $0x78] sm:$0xff]
        %353 = vmatpush.msra.mxu0 %v352
        %354 = vmatpush.msra.mxu0 %v351
        %355 = vmatpush.msra.mxu0 %v350
        %356 = vmatpush.msra.mxu0 %v349
        %357 = vmatpush.msra.mxu0 %v348
        %358 = vmatpush.msra.mxu0 %v347
        %359 = vmatpush.msra.mxu0 %v346
        %360 = vmatpush.msra.mxu0 %v345
        %361 = vmatpush.msra.mxu0 %v344
        %362 = vmatpush.msra.mxu0 %v343
        %363 = vmatpush.msra.mxu0 %v342
        %364 = vmatpush.msra.mxu0 %v341
        %365 = vmatpush.msra.mxu0 %v340
        %366 = vmatpush.msra.mxu0 %v339
        %367 = vmatpush.msra.mxu0 %v338
        %368 = vmatpush.msra.mxu0 %v337
        %369 = vmatmul.f32.gmra.mxu0 %v300
        %v370 = vpop.f32.mrf.mxu0
        %v371 = vadd.f32 0.0, %v370
        %372 = vdwg.mxu0
        %v373 = vsub.f32 0.0, %v335
        %v374 = vmul.f32 %v373, 1.442695
        %v375 = vpow.pop %v374
        %v376 = vadd.f32 %v375, 1.0
        %v377 = vrcp.pop %v376
        %v378 = vmul.f32 %v376, %v377
        %v379 = vsub.f32 1.0, %v378
        %v380 = vmul.f32 %v377, %v379
        %v381 = vadd.f32 %v377, %v380
        %vm382 = vweird.f32 %v376
        %vm383 = vweird.f32 %v377
        %vm384 = vmor %vm382, %vm383
        %v385 = vsel %vm384, %v377, %v381
        %v386 = vand.u32 2147483647, %v376
        %vm387 = vcmp.eq.f32.partialorder %v386, 8.507059e+37
        %v388 = vand.u32 %v376, 2147483648
        %v389 = vor.u32 1.1754944e-38, %v388
        %v390 = vsel %vm387, %v389, %v385
        %v391 = vmul.f32 %v335, %v390
        %v392 = vmul.f32 %v391, %v371
        %v393 = vld [vmem:[#allocation8] sm:$0xff]
        %v394 = vld [vmem:[#allocation8 + $0x8] sm:$0xff]
        %v395 = vld [vmem:[#allocation8 + $0x10] sm:$0xff]
        %v396 = vld [vmem:[#allocation8 + $0x18] sm:$0xff]
        %v397 = vld [vmem:[#allocation8 + $0x20] sm:$0xff]
        %v398 = vld [vmem:[#allocation8 + $0x28] sm:$0xff]
        %v399 = vld [vmem:[#allocation8 + $0x30] sm:$0xff]
        %v400 = vld [vmem:[#allocation8 + $0x38] sm:$0xff]
        %v401 = vld [vmem:[#allocation8 + $0x40] sm:$0xff]
        %v402 = vld [vmem:[#allocation8 + $0x48] sm:$0xff]
        %v403 = vld [vmem:[#allocation8 + $0x50] sm:$0xff]
        %v404 = vld [vmem:[#allocation8 + $0x58] sm:$0xff]
        %v405 = vld [vmem:[#allocation8 + $0x60] sm:$0xff]
        %v406 = vld [vmem:[#allocation8 + $0x68] sm:$0xff]
        %v407 = vld [vmem:[#allocation8 + $0x70] sm:$0xff]
        %v408 = vld [vmem:[#allocation8 + $0x78] sm:$0xff]
        %409 = vmatpush.msra.mxu0 %v408
        %410 = vmatpush.msra.mxu0 %v407
        %411 = vmatpush.msra.mxu0 %v406
        %412 = vmatpush.msra.mxu0 %v405
        %413 = vmatpush.msra.mxu0 %v404
        %414 = vmatpush.msra.mxu0 %v403
        %415 = vmatpush.msra.mxu0 %v402
        %416 = vmatpush.msra.mxu0 %v401
        %417 = vmatpush.msra.mxu0 %v400
        %418 = vmatpush.msra.mxu0 %v399
        %419 = vmatpush.msra.mxu0 %v398
        %420 = vmatpush.msra.mxu0 %v397
        %421 = vmatpush.msra.mxu0 %v396
        %422 = vmatpush.msra.mxu0 %v395
        %423 = vmatpush.msra.mxu0 %v394
        %424 = vmatpush.msra.mxu0 %v393
        %425 = vmatmul.f32.gmra.mxu0 %v392
        %v426 = vpop.f32.mrf.mxu0
        %v427 = vadd.f32 0.0, %v426
        %428 = vdwg.mxu0
        %429 = vst [vmem:[%s298] sm:$0xff] %v427
        %s430 = sand.u32 %s147, 1
        %s431 = scalar_lea.sflag [#allocation4], %s430
        %s432 = sand.u32 %s147, 1
        %s433 = smul.addr %s432, 8
        %s434 = scalar_lea.vmem [#allocation10], %s433
        // Predicated region
        $region53: #{tpu_custom_call.1} parent=35 // pred_check
          %p435 = pneg %p157
        $region54: #{tpu_custom_call.1} parent=35 // pred_check_branch
          %437 = sbr.rel (%p435) target = $region56
        $region55: #{tpu_custom_call.1} parent=35 // pred_region
          %439 = vsyncadd %s431, 0
          %s440 = smul.addr %s27, 8
          %s441 = scalar_lea.hbm %s4, %s440
          %s443 = sshll.u32 %s434, 4
          %s444 = int_to_ptr.vmem [resolvable:$true] %s443
          %s445 = sshll.u32 %s441, 4
          %s446 = int_to_ptr.hbm [resolvable:$true] %s445
          %448 = dma.vmem_to_hbm [thread:$0]  %s444, 128, %s446, %s431
        $region56: #{tpu_custom_call.1} parent=35 // pred_fallthru
          _
      $region36: #{tpu_custom_call.1} parent=5 // pred_fallthru
        _
      %p449 = scmp.le.s32.totalorder 2, %s18
      // Predicated region
      $region57: #{tpu_custom_call.1} parent=5 // pred_check
        %p450 = pneg %p449
      $region58: #{tpu_custom_call.1} parent=5 // pred_check_branch
        %452 = sbr.rel (%p450) target = $region60
      $region59: #{tpu_custom_call.1} parent=5 // pred_region
        %s453 = ssub.s32 %s18, 2
        // Predicated region
        $region61: #{tpu_custom_call.1} parent=59 // pred_check
          %p454 = pneg %p163
        $region62: #{tpu_custom_call.1} parent=59 // pred_check_branch
          %456 = sbr.rel (%p454) target = $region64
        $region63: #{tpu_custom_call.1} parent=59 // pred_region
          %s457 = sand.u32 %s148, 1
          %s458 = scalar_lea.sflag [#allocation4], %s457
          %s459 = sand.u32 %s148, 1
          %s460 = smul.addr %s459, 8
          %s461 = scalar_lea.vmem [#allocation10], %s460
          %463 = dma.done %s458, 128
        $region64: #{tpu_custom_call.1} parent=59 // pred_fallthru
          _
      $region60: #{tpu_custom_call.1} parent=5 // pred_fallthru
        _
    $region6: #{tpu_custom_call.1} parent=1 // loop_footer
      %s22 = sadd.s32 1, %s18
    $region7: #{tpu_custom_call.1} parent=1 // loop_footer_branch
      %17 = sbr.rel target = $region3
    $region8: #{tpu_custom_call.1} parent=1 // loop_exit
      _
    %464 = vsyncpa [#allocation3], 1
    %s465 = scalar_lea.sflag [#allocation3], 1
    %466 = vsyncpa %s465, 1
    %467 = vsyncpa [#allocation6], 1
    %468 = vsyncpa [#allocation9], 1
    %469 = vsyncpa [#allocation4], 1
    %s470 = scalar_lea.sflag [#allocation4], 1
    %471 = vsyncpa %s470, 1

</llo_original>
